<compile_context>
chip_gen: v7x
topology: tpu7x:2x2x1
jax: 0.10.0
libtpu: 0.0.40
codegen_flags: <defaults>
</compile_context>

<pallas_src>
import jax
import jax.numpy as jnp
from jax.experimental import pallas as pl
from jax.experimental.pallas import tpu as pltpu


def _leaky_relu(h, slope=0.01):
    return jnp.where(h > 0, h, slope * h)


def _softplus(t):
    # numerically stable softplus = log(1 + exp(t))
    return jnp.logaddexp(t, 0.0)


def mi_kernel(x_ref, y_ref, wx_ref, wy_ref, b1_ref, w2_ref, b2_ref, o_ref):
    B = y_ref.shape[0]

    x = x_ref[...].astype(jnp.float32)      # (B, Dx)
    y = y_ref[...].astype(jnp.float32)      # (B, Dy)
    wx = wx_ref[...]                        # (Dx, H)
    wy = wy_ref[...]                        # (Dy, H)
    b1 = b1_ref[...]                        # (1, H)
    w2 = w2_ref[...]                        # (1, H)  (w2 row vector)
    b2 = b2_ref[0, 0]                       # scalar (SMEM)

    # Shuffled y built in-kernel (XLU sublane rotate): sy[i] = y[(i+1) % B].
    sy = pltpu.roll(y, shift=B - 1, axis=0)                               # (B, Dy)

    # Shared x branch: one MXU push, bias broadcast added once.
    hx = jnp.dot(x, wx, preferred_element_type=jnp.float32) + b1          # (B, H)

    # Joint + marginal y rows stacked -> one MXU push instead of two.
    ycat = jnp.concatenate([y, sy], axis=0)                               # (2B, Dy)
    hy = jnp.dot(ycat, wy, preferred_element_type=jnp.float32)            # (2B, H)

    h = _leaky_relu(hy + jnp.concatenate([hx, hx], axis=0))               # (2B, H)

    # Output layer has N=1: use VPU multiply + lane reduction instead of MXU.
    s = jnp.sum(h * w2, axis=-1, keepdims=True) + b2                      # (2B, 1)

    s_joint = s[:B]     # scores on P(X,Y)
    s_marg = s[B:]      # scores on P(X)P(Y)

    mi = -jnp.mean(_softplus(-s_joint)) - jnp.mean(_softplus(s_marg))
    o_ref[...] = jnp.reshape(mi, (1, 1))


def mi_forward(x, y, params):
    """x: (B, Dx), y: (B, Dy), params dict with wx, wy, b1, w2, b2. Returns scalar MI."""
    vmem = pl.BlockSpec(memory_space=pltpu.MemorySpace.VMEM)
    smem = pl.BlockSpec(memory_space=pltpu.MemorySpace.SMEM)
    out = pl.pallas_call(
        mi_kernel,
        out_shape=jax.ShapeDtypeStruct((1, 1), jnp.float32),
        in_specs=[vmem, vmem, vmem, vmem, vmem, vmem, smem],
        out_specs=vmem,
    )(
        x,
        y,
        params["wx"],
        params["wy"],
        params["b1"],
        params["w2"].reshape(1, -1),   # (H, 1) -> (1, H) row for the VPU reduction
        params["b2"],
    )
    return out[0, 0]


def mi_reference(x, y, params):
    """Pure-JAX reference for correctness check."""
    sy = jnp.roll(y, shift=-1, axis=0)

    def disc(y_in):
        h = x @ params["wx"] + y_in @ params["wy"] + params["b1"]
        h = jnp.where(h > 0, h, 0.01 * h)
        return (h @ params["w2"] + params["b2"])[:, 0]

    sj = disc(y)
    sm = disc(sy)
    return -jnp.mean(jax.nn.softplus(-sj)) - jnp.mean(jax.nn.softplus(sm))


def init_params(key, x_dim, y_dim):
    # Deterministic synthetic init (shapes follow Disc -> MLP(x_dim+y_dim, 1, y_dim, n_layers=2))
    h = y_dim
    k1, k2, k3, k4 = jax.random.split(key, 4)
    scale1 = 1.0 / jnp.sqrt(x_dim + y_dim)
    scale2 = 1.0 / jnp.sqrt(h)
    w1 = jax.random.uniform(k1, (x_dim + y_dim, h), jnp.float32, -scale1, scale1)
    return {
        "wx": w1[:x_dim, :],                                                    # (Dx, H)
        "wy": w1[x_dim:, :],                                                    # (Dy, H)
        "b1": jax.random.uniform(k2, (1, h), jnp.float32, -scale1, scale1),     # (1, H)
        "w2": jax.random.uniform(k3, (h, 1), jnp.float32, -scale2, scale2),     # (H, 1)
        "b2": jax.random.uniform(k4, (1, 1), jnp.float32, -scale2, scale2),     # (1, 1)
    }


if __name__ == "__main__":
    B, x_dim, y_dim = 8, 32, 32  # hidden_dim == y_dim per Disc

    key = jax.random.PRNGKey(0)
    kx, ky, kp = jax.random.split(key, 3)
    x = jax.random.normal(kx, (B, x_dim), jnp.float32)
    y = jax.random.normal(ky, (B, y_dim), jnp.float32)
    params = init_params(kp, x_dim, y_dim)

    mi = jax.block_until_ready(mi_forward(x, y, params))
    ref = jax.block_until_ready(mi_reference(x, y, params))

    assert jnp.allclose(mi, ref, atol=1e-5, rtol=1e-5), (mi, ref)
    print("KERNEL_OK")
</pallas_src>

<mosaic_0001>
module attributes {stable_mosaic.version = 11 : i64} {
  func.func @mi_kernel(%arg0: memref<8x32xf32, #tpu.memory_space<vmem>>, %arg1: memref<8x32xf32, #tpu.memory_space<vmem>>, %arg2: memref<32x32xf32, #tpu.memory_space<vmem>>, %arg3: memref<32x32xf32, #tpu.memory_space<vmem>>, %arg4: memref<1x32xf32, #tpu.memory_space<vmem>>, %arg5: memref<1x32xf32, #tpu.memory_space<vmem>>, %arg6: memref<1x1xf32, #tpu.memory_space<smem>>, %arg7: memref<1x1xf32, #tpu.memory_space<vmem>>) attributes {dimension_semantics = [], scalar_prefetch = 0 : i64, scratch_operands = 0 : i64, tpu.core_type = #tpu.core_type<tc>} {
    %c0 = arith.constant 0 : index
    %c0_0 = arith.constant 0 : index
    %0 = vector.load %arg0[%c0, %c0_0] : memref<8x32xf32, #tpu.memory_space<vmem>>, vector<8x32xf32>
    %c0_1 = arith.constant 0 : index
    %c0_2 = arith.constant 0 : index
    %1 = vector.load %arg1[%c0_1, %c0_2] : memref<8x32xf32, #tpu.memory_space<vmem>>, vector<8x32xf32>
    %c0_3 = arith.constant 0 : index
    %c0_4 = arith.constant 0 : index
    %2 = vector.load %arg2[%c0_3, %c0_4] : memref<32x32xf32, #tpu.memory_space<vmem>>, vector<32x32xf32>
    %c0_5 = arith.constant 0 : index
    %c0_6 = arith.constant 0 : index
    %3 = vector.load %arg3[%c0_5, %c0_6] : memref<32x32xf32, #tpu.memory_space<vmem>>, vector<32x32xf32>
    %c0_7 = arith.constant 0 : index
    %c0_8 = arith.constant 0 : index
    %4 = vector.load %arg4[%c0_7, %c0_8] : memref<1x32xf32, #tpu.memory_space<vmem>>, vector<1x32xf32>
    %c0_9 = arith.constant 0 : index
    %c0_10 = arith.constant 0 : index
    %5 = vector.load %arg5[%c0_9, %c0_10] : memref<1x32xf32, #tpu.memory_space<vmem>>, vector<1x32xf32>
    %c0_11 = arith.constant 0 : index
    %c0_12 = arith.constant 0 : index
    %6 = memref.load %arg6[%c0_11, %c0_12] : memref<1x1xf32, #tpu.memory_space<smem>>
    %c7_i32 = arith.constant 7 : i32
    %7 = tpu.dynamic_rotate %1 by %c7_i32 dim 0 : vector<8x32xf32>, i32 -> vector<8x32xf32>
    %cst = arith.constant dense<0.000000e+00> : vector<8x32xf32>
    %8 = tpu.matmul %0, %2, %cst {dimension_numbers = #tpu.dot_dimension_numbers<[1], [0], [0], [1], [0, 0, 1, 1], [], []>} : vector<8x32xf32>, vector<32x32xf32>, vector<8x32xf32> -> vector<8x32xf32>
    %9 = vector.broadcast %4 : vector<1x32xf32> to vector<8x32xf32>
    %10 = arith.addf %8, %9 : vector<8x32xf32>
    %11 = tpu.concatenate %1, %7 in 0 : vector<8x32xf32>, vector<8x32xf32> -> vector<16x32xf32>
    %cst_13 = arith.constant dense<0.000000e+00> : vector<16x32xf32>
    %12 = tpu.matmul %11, %3, %cst_13 {dimension_numbers = #tpu.dot_dimension_numbers<[1], [0], [0], [1], [0, 0, 1, 1], [], []>} : vector<16x32xf32>, vector<32x32xf32>, vector<16x32xf32> -> vector<16x32xf32>
    %13 = tpu.concatenate %10, %10 in 0 : vector<8x32xf32>, vector<8x32xf32> -> vector<16x32xf32>
    %14 = arith.addf %12, %13 : vector<16x32xf32>
    %cst_14 = arith.constant 0.000000e+00 : f32
    %15 = vector.broadcast %cst_14 : f32 to vector<16x32xf32>
    %16 = arith.cmpf ogt, %14, %15 : vector<16x32xf32>
    %cst_15 = arith.constant 0.00999999977 : f32
    %17 = vector.broadcast %cst_15 : f32 to vector<16x32xf32>
    %18 = arith.mulf %17, %14 : vector<16x32xf32>
    %19 = arith.select %16, %14, %18 : vector<16x32xi1>, vector<16x32xf32>
    %20 = vector.broadcast %5 : vector<1x32xf32> to vector<16x32xf32>
    %21 = arith.mulf %19, %20 : vector<16x32xf32>
    %cst_16 = arith.constant dense<0.000000e+00> : vector<16xf32>
    %22 = vector.multi_reduction <add>, %21, %cst_16 [1] : vector<16x32xf32> to vector<16xf32>
    %23 = vector.shape_cast %22 : vector<16xf32> to vector<16x1xf32>
    %24 = vector.broadcast %6 : f32 to vector<16x1xf32>
    %25 = arith.addf %23, %24 : vector<16x1xf32>
    %26 = vector.extract_strided_slice %25 {offsets = [0, 0], sizes = [8, 1], strides = [1, 1]} : vector<16x1xf32> to vector<8x1xf32>
    %27 = vector.extract_strided_slice %25 {offsets = [8, 0], sizes = [8, 1], strides = [1, 1]} : vector<16x1xf32> to vector<8x1xf32>
    %cst_17 = arith.constant 0.000000e+00 : f32
    %28 = vector.broadcast %cst_17 : f32 to vector<8x1xf32>
    %29 = arith.subf %28, %26 : vector<8x1xf32>
    %cst_18 = arith.constant 0.000000e+00 : f32
    %30 = vector.broadcast %cst_18 : f32 to vector<8x1xf32>
    %31 = arith.maximumf %29, %30 : vector<8x1xf32>
    %32 = vector.broadcast %cst_18 : f32 to vector<8x1xf32>
    %33 = arith.subf %29, %32 : vector<8x1xf32>
    %34 = arith.cmpf one, %33, %33 : vector<8x1xf32>
    %35 = vector.broadcast %cst_18 : f32 to vector<8x1xf32>
    %36 = arith.addf %29, %35 : vector<8x1xf32>
    %37 = math.absf %33 : vector<8x1xf32>
    %cst_19 = arith.constant 0.000000e+00 : f32
    %38 = vector.broadcast %cst_19 : f32 to vector<8x1xf32>
    %39 = arith.subf %38, %37 : vector<8x1xf32>
    %40 = math.exp %39 : vector<8x1xf32>
    %41 = math.log1p %40 : vector<8x1xf32>
    %42 = arith.addf %31, %41 : vector<8x1xf32>
    %43 = arith.select %34, %36, %42 : vector<8x1xi1>, vector<8x1xf32>
    %44 = vector.shape_cast %43 : vector<8x1xf32> to vector<1x8x1xf32>
    %cst_20 = arith.constant dense<0.000000e+00> : vector<1xf32>
    %45 = vector.multi_reduction <add>, %44, %cst_20 [1, 2] : vector<1x8x1xf32> to vector<1xf32>
    %46 = vector.shape_cast %45 : vector<1xf32> to vector<1x1x1xf32>
    %47 = vector.extract %46[0, 0, 0] : f32 from vector<1x1x1xf32>
    %cst_21 = arith.constant 8.000000e+00 : f32
    %48 = arith.divf %47, %cst_21 : f32
    %cst_22 = arith.constant 0.000000e+00 : f32
    %49 = arith.subf %cst_22, %48 : f32
    %cst_23 = arith.constant 0.000000e+00 : f32
    %50 = vector.broadcast %cst_23 : f32 to vector<8x1xf32>
    %51 = arith.maximumf %27, %50 : vector<8x1xf32>
    %52 = vector.broadcast %cst_23 : f32 to vector<8x1xf32>
    %53 = arith.subf %27, %52 : vector<8x1xf32>
    %54 = arith.cmpf one, %53, %53 : vector<8x1xf32>
    %55 = vector.broadcast %cst_23 : f32 to vector<8x1xf32>
    %56 = arith.addf %27, %55 : vector<8x1xf32>
    %57 = math.absf %53 : vector<8x1xf32>
    %cst_24 = arith.constant 0.000000e+00 : f32
    %58 = vector.broadcast %cst_24 : f32 to vector<8x1xf32>
    %59 = arith.subf %58, %57 : vector<8x1xf32>
    %60 = math.exp %59 : vector<8x1xf32>
    %61 = math.log1p %60 : vector<8x1xf32>
    %62 = arith.addf %51, %61 : vector<8x1xf32>
    %63 = arith.select %54, %56, %62 : vector<8x1xi1>, vector<8x1xf32>
    %64 = vector.shape_cast %63 : vector<8x1xf32> to vector<1x8x1xf32>
    %cst_25 = arith.constant dense<0.000000e+00> : vector<1xf32>
    %65 = vector.multi_reduction <add>, %64, %cst_25 [1, 2] : vector<1x8x1xf32> to vector<1xf32>
    %66 = vector.shape_cast %65 : vector<1xf32> to vector<1x1x1xf32>
    %67 = vector.extract %66[0, 0, 0] : f32 from vector<1x1x1xf32>
    %cst_26 = arith.constant 8.000000e+00 : f32
    %68 = arith.divf %67, %cst_26 : f32
    %69 = arith.subf %49, %68 : f32
    %70 = vector.broadcast %69 : f32 to vector<1x1xf32>
    %c0_27 = arith.constant 0 : index
    %c0_28 = arith.constant 0 : index
    %71 = vector.load %arg7[%c0_27, %c0_28] : memref<1x1xf32, #tpu.memory_space<vmem>>, vector<1x1xf32>
    tpu.vector_store %arg7[%c0_27, %c0_28], %70 {strides = array<i32>} : memref<1x1xf32, #tpu.memory_space<vmem>>, vector<1x1xf32>,
    return
  }
}

</mosaic_0001>

<llo_original>
// kernel: tpu_custom_call.1
$region0: #{tpu_custom_call.1}
  #allocation0 [shape = 'u32[]', space=smem, size = 0x4, offset = 0x4, fixed_abs, tag = 'smem constant byte address 0x4 - core index']
  #allocation1 [shape = 'u32[144,128]{1,0:T(1,128)}', space=vmem, size = 0x12000, scoped, tag = 'internal scratch']
  #allocation2 [shape = 'f32[1,1]{1,0:T(1,128)S(6)}', space=smem, size = 0x200, scoped, tag = 'scoped memory for tpu_custom_call.1']
  %s0 = inlined_call_operand.hbm [shape: f32[8,32], index: 0, kind: input, shape index: {}]
  %s1 = inlined_call_operand.hbm [shape: f32[8,32], index: 1, kind: input, shape index: {}]
  %s2 = inlined_call_operand.hbm [shape: f32[32,32], index: 2, kind: input, shape index: {}]
  %s3 = inlined_call_operand.hbm [shape: f32[32,32], index: 3, kind: input, shape index: {}]
  %s4 = inlined_call_operand.vmem [shape: f32[1,32], index: 4, kind: input, shape index: {}]
  %s5 = inlined_call_operand.vmem [shape: f32[1,32], index: 5, kind: input, shape index: {}]
  %s6 = inlined_call_operand.<no memory space> [shape: f32[1,1], index: 6, kind: input, shape index: {}]
  %s7 = inlined_call_operand.hbm [shape: f32[1,1], index: 7, kind: output, shape index: {}]
  %s8 = sld [smem:[#allocation0]]
  $region54: #{tpu_custom_call.1} parent=0
    _
  %s10 = ssub.s32 1, %s8
  %s11 = scalar_select 0, %s10, %s8
  %12 = sst [smem:[#allocation2]] %s6
  $region1: #{tpu_custom_call.1} parent=0
    #allocation3 [shape = 'u8[4096]{0}', space=vmem, size = 0x1000, scoped, tag = 'input window, operand 0, single buffered']
    #allocation4 [shape = 's32[1]{0}', space=sflag, size = 0x4, scoped, tag = 'scoped memory for tpu_custom_call.1']
    #allocation5 [shape = 's32[1]{0}', space=sflag, size = 0x4, scoped, tag = 'scoped memory for tpu_custom_call.1']
    #allocation6 [shape = 'u8[4096]{0}', space=vmem, size = 0x1000, scoped, tag = 'input window, operand 1, single buffered']
    #allocation7 [shape = 's32[1]{0}', space=sflag, size = 0x4, scoped, tag = 'scoped memory for tpu_custom_call.1']
    #allocation8 [shape = 'u8[16384]{0}', space=vmem, size = 0x4000, scoped, tag = 'input window, operand 2, single buffered']
    #allocation9 [shape = 'u8[16384]{0}', space=vmem, size = 0x4000, scoped, tag = 'input window, operand 3, single buffered']
    #allocation10 [shape = 's32[1]{0}', space=sflag, size = 0x4, scoped, tag = 'scoped memory for tpu_custom_call.1']
    #allocation11 [shape = 'u8[512]{0}', space=vmem, size = 0x400, scoped, tag = 'output window, operand 0, single buffered']
    %13 = vsyncpa [#allocation4], 0
    %14 = vsyncpa [#allocation7], 0
    %15 = vsyncpa [#allocation10], 0
    %16 = vsyncpa [#allocation5], 0
    // Predicated region
    $region2: #{tpu_custom_call.1} parent=1 // pred_check
      _
    $region3: #{tpu_custom_call.1} parent=1 // pred_check_branch
      %18 = sbr.rel (0) target = $region5
    $region4: #{tpu_custom_call.1} parent=1 // pred_region
      %s20 = ssub.s32 128, 128
      %21 = vsyncadd [#allocation4], %s20
      %s23 = sshll.u32 [#allocation3], 4
      %s24 = int_to_ptr.vmem [resolvable:$true] %s23
      %26 = dma.hbm_to_vmem [thread:$0]  %s0, 128, %s24, [#allocation4]
    $region5: #{tpu_custom_call.1} parent=1 // pred_fallthru
      _
    // Predicated region
    $region6: #{tpu_custom_call.1} parent=1 // pred_check
      _
    $region7: #{tpu_custom_call.1} parent=1 // pred_check_branch
      %28 = sbr.rel (0) target = $region9
    $region8: #{tpu_custom_call.1} parent=1 // pred_region
      %s30 = ssub.s32 128, 128
      %31 = vsyncadd [#allocation7], %s30
      %s33 = sshll.u32 [#allocation6], 4
      %s34 = int_to_ptr.vmem [resolvable:$true] %s33
      %36 = dma.hbm_to_vmem [thread:$0]  %s1, 128, %s34, [#allocation7]
    $region9: #{tpu_custom_call.1} parent=1 // pred_fallthru
      _
    // Predicated region
    $region10: #{tpu_custom_call.1} parent=1 // pred_check
      _
    $region11: #{tpu_custom_call.1} parent=1 // pred_check_branch
      %38 = sbr.rel (0) target = $region13
    $region12: #{tpu_custom_call.1} parent=1 // pred_region
      %s40 = ssub.s32 512, 512
      %41 = vsyncadd [#allocation7], %s40
      %s42 = sshll.u32 [#allocation8], 4
      %s43 = int_to_ptr.vmem [resolvable:$true] %s42
      %48 = dma.hbm_to_vmem [thread:$0]  %s2, 512, %s43, [#allocation7], 128, 128, 8
    $region13: #{tpu_custom_call.1} parent=1 // pred_fallthru
      _
    // Predicated region
    $region14: #{tpu_custom_call.1} parent=1 // pred_check
      _
    $region15: #{tpu_custom_call.1} parent=1 // pred_check_branch
      %50 = sbr.rel (0) target = $region17
    $region16: #{tpu_custom_call.1} parent=1 // pred_region
      %s52 = ssub.s32 512, 512
      %53 = vsyncadd [#allocation10], %s52
      %s54 = sshll.u32 [#allocation9], 4
      %s55 = int_to_ptr.vmem [resolvable:$true] %s54
      %60 = dma.hbm_to_vmem [thread:$0]  %s3, 512, %s55, [#allocation10], 128, 128, 8
    $region17: #{tpu_custom_call.1} parent=1 // pred_fallthru
      _
    // Predicated region
    $region18: #{tpu_custom_call.1} parent=1 // pred_check
      _
    $region19: #{tpu_custom_call.1} parent=1 // pred_check_branch
      %62 = sbr.rel (0) target = $region21
    $region20: #{tpu_custom_call.1} parent=1 // pred_region
      _
    $region21: #{tpu_custom_call.1} parent=1 // pred_fallthru
      _
    // Predicated region
    $region22: #{tpu_custom_call.1} parent=1 // pred_check
      _
    $region23: #{tpu_custom_call.1} parent=1 // pred_check_branch
      %64 = sbr.rel (0) target = $region25
    $region24: #{tpu_custom_call.1} parent=1 // pred_region
      _
    $region25: #{tpu_custom_call.1} parent=1 // pred_fallthru
      _
    // Predicated region
    $region26: #{tpu_custom_call.1} parent=1 // pred_check
      _
    $region27: #{tpu_custom_call.1} parent=1 // pred_check_branch
      %66 = sbr.rel (0) target = $region29
    $region28: #{tpu_custom_call.1} parent=1 // pred_region
      _
    $region29: #{tpu_custom_call.1} parent=1 // pred_fallthru
      _
    // Predicated region
    $region30: #{tpu_custom_call.1} parent=1 // pred_check
      _
    $region31: #{tpu_custom_call.1} parent=1 // pred_check_branch
      %68 = sbr.rel (0) target = $region33
    $region32: #{tpu_custom_call.1} parent=1 // pred_region
      %69 = dma.done [#allocation4], 128
    $region33: #{tpu_custom_call.1} parent=1 // pred_fallthru
      _
    // Predicated region
    $region34: #{tpu_custom_call.1} parent=1 // pred_check
      _
    $region35: #{tpu_custom_call.1} parent=1 // pred_check_branch
      %71 = sbr.rel (0) target = $region37
    $region36: #{tpu_custom_call.1} parent=1 // pred_region
      %72 = dma.done [#allocation7], 128
    $region37: #{tpu_custom_call.1} parent=1 // pred_fallthru
      _
    // Predicated region
    $region38: #{tpu_custom_call.1} parent=1 // pred_check
      _
    $region39: #{tpu_custom_call.1} parent=1 // pred_check_branch
      %74 = sbr.rel (0) target = $region41
    $region40: #{tpu_custom_call.1} parent=1 // pred_region
      %75 = dma.done [#allocation7], 512
    $region41: #{tpu_custom_call.1} parent=1 // pred_fallthru
      _
    // Predicated region
    $region42: #{tpu_custom_call.1} parent=1 // pred_check
      _
    $region43: #{tpu_custom_call.1} parent=1 // pred_check_branch
      %77 = sbr.rel (0) target = $region45
    $region44: #{tpu_custom_call.1} parent=1 // pred_region
      %78 = dma.done [#allocation10], 512
    $region45: #{tpu_custom_call.1} parent=1 // pred_fallthru
      _
    %v79 = vld [vmem:[#allocation3] sm:$0xff]
    %v80 = vld [vmem:[#allocation6] sm:$0xff]
    %v81 = vld [vmem:[#allocation8] sm:$0xff]
    %v82 = vld [vmem:[#allocation8 + $0x8] sm:$0xff]
    %v83 = vld [vmem:[#allocation8 + $0x10] sm:$0xff]
    %v84 = vld [vmem:[#allocation8 + $0x18] sm:$0xff]
    %v85 = vld [vmem:[#allocation9] sm:$0xff]
    %v86 = vld [vmem:[#allocation9 + $0x8] sm:$0xff]
    %v87 = vld [vmem:[#allocation9 + $0x10] sm:$0xff]
    %v88 = vld [vmem:[#allocation9 + $0x18] sm:$0xff]
    %v89 = vld [vmem:[%s4] sm:$0x1]
    %v90 = vld [vmem:[%s5] sm:$0x1]
    %s91 = sld [smem:[#allocation2]]
    %v92 = vrot.slane %v80, 1
    %v94 = vlaneseq
    %v95 = vshrl.u32 %v94, 7
    %v96 = vsub.s32 0, %v95
    %v97 = vrot.slane %v89, %v96
    %vm99 = vcmask 261120
    %v101 = vsel %vm99, %v79, 0
    %103 = vmatprep.subr.mxu0 0.0
    %104 = vmatpush1.msra.mxu0 %v81
    %105 = vmatprep.subr.mxu0 0.0
    %106 = vmatpush1.msra.mxu0 %v82
    %107 = vmatprep.subr.mxu0 0.0
    %108 = vmatpush1.msra.mxu0 %v83
    %109 = vmatprep.subr.mxu0 0.0
    %110 = vmatpush1.msra.mxu0 %v84
    %111 = vmatprep.subr.mxu0 0.0
    %112 = vmatpush1.msra.mxu0 0.0
    %113 = vmatprep.subr.mxu0 0.0
    %114 = vmatpush1.msra.mxu0 0.0
    %115 = vmatprep.subr.mxu0 0.0
    %116 = vmatpush1.msra.mxu0 0.0
    %117 = vmatprep.subr.mxu0 0.0
    %118 = vmatpush1.msra.mxu0 0.0
    %119 = vmatprep.subr.mxu0 0.0
    %120 = vmatpush1.msra.mxu0 0.0
    %121 = vmatprep.subr.mxu0 0.0
    %122 = vmatpush1.msra.mxu0 0.0
    %123 = vmatprep.subr.mxu0 0.0
    %124 = vmatpush1.msra.mxu0 0.0
    %125 = vmatprep.subr.mxu0 0.0
    %126 = vmatpush1.msra.mxu0 0.0
    %127 = vmatprep.subr.mxu0 0.0
    %128 = vmatpush1.msra.mxu0 0.0
    %129 = vmatprep.subr.mxu0 0.0
    %130 = vmatpush1.msra.mxu0 0.0
    %131 = vmatprep.subr.mxu0 0.0
    %132 = vmatpush1.msra.mxu0 0.0
    %133 = vmatprep.subr.mxu0 0.0
    %134 = vmatpush1.msra.mxu0 0.0
    %135 = vmatprep.subr.mxu0 0.0
    %136 = vmatpush1.msra.mxu0 0.0
    %137 = vmatprep.subr.mxu0 0.0
    %138 = vmatpush1.msra.mxu0 0.0
    %139 = vmatprep.subr.mxu0 0.0
    %140 = vmatpush1.msra.mxu0 0.0
    %141 = vmatprep.subr.mxu0 0.0
    %142 = vmatpush1.msra.mxu0 0.0
    %143 = vmatprep.subr.mxu0 0.0
    %144 = vmatpush1.msra.mxu0 0.0
    %145 = vmatprep.subr.mxu0 0.0
    %146 = vmatpush1.msra.mxu0 0.0
    %147 = vmatprep.subr.mxu0 0.0
    %148 = vmatpush1.msra.mxu0 0.0
    %149 = vmatprep.subr.mxu0 0.0
    %150 = vmatpush1.msra.mxu0 0.0
    %151 = vmatprep.subr.mxu0 0.0
    %152 = vmatpush1.msra.mxu0 0.0
    %153 = vmatprep.subr.mxu0 0.0
    %154 = vmatpush1.msra.mxu0 0.0
    %155 = vmatprep.subr.mxu0 0.0
    %156 = vmatpush1.msra.mxu0 0.0
    %157 = vmatprep.subr.mxu0 0.0
    %158 = vmatpush1.msra.mxu0 0.0
    %159 = vmatprep.subr.mxu0 0.0
    %160 = vmatpush1.msra.mxu0 0.0
    %161 = vmatprep.subr.mxu0 0.0
    %162 = vmatpush1.msra.mxu0 0.0
    %163 = vmatprep.subr.mxu0 0.0
    %164 = vmatpush1.msra.mxu0 0.0
    %165 = vmatprep.subr.mxu0 0.0
    %166 = vmatpush1.msra.mxu0 0.0
    %167 = vmatprep.mubr.f32.mxu0 0.0
    %168 = vmatmul.mubr.f32.gmra.mrb[0].mxu0 %v101
    %v169 = vpop.f32.mrb[0].mxu0
    %v170 = vadd.f32 %v97, %v169
    %v171 = vpop.f32.mrb[0].mxu0
    %172 = vdwg.mxu0
    %v174 = vsel %vm99, %v80, 0
    %v177 = vsel %vm99, %v92, 0
    %179 = vmatprep.subr.mxu0 0.0
    %180 = vmatpush1.msra.mxu0 %v85
    %181 = vmatprep.subr.mxu0 0.0
    %182 = vmatpush1.msra.mxu0 %v86
    %183 = vmatprep.subr.mxu0 0.0
    %184 = vmatpush1.msra.mxu0 %v87
    %185 = vmatprep.subr.mxu0 0.0
    %186 = vmatpush1.msra.mxu0 %v88
    %187 = vmatprep.subr.mxu0 0.0
    %188 = vmatpush1.msra.mxu0 0.0
    %189 = vmatprep.subr.mxu0 0.0
    %190 = vmatpush1.msra.mxu0 0.0
    %191 = vmatprep.subr.mxu0 0.0
    %192 = vmatpush1.msra.mxu0 0.0
    %193 = vmatprep.subr.mxu0 0.0
    %194 = vmatpush1.msra.mxu0 0.0
    %195 = vmatprep.subr.mxu0 0.0
    %196 = vmatpush1.msra.mxu0 0.0
    %197 = vmatprep.subr.mxu0 0.0
    %198 = vmatpush1.msra.mxu0 0.0
    %199 = vmatprep.subr.mxu0 0.0
    %200 = vmatpush1.msra.mxu0 0.0
    %201 = vmatprep.subr.mxu0 0.0
    %202 = vmatpush1.msra.mxu0 0.0
    %203 = vmatprep.subr.mxu0 0.0
    %204 = vmatpush1.msra.mxu0 0.0
    %205 = vmatprep.subr.mxu0 0.0
    %206 = vmatpush1.msra.mxu0 0.0
    %207 = vmatprep.subr.mxu0 0.0
    %208 = vmatpush1.msra.mxu0 0.0
    %209 = vmatprep.subr.mxu0 0.0
    %210 = vmatpush1.msra.mxu0 0.0
    %211 = vmatprep.subr.mxu0 0.0
    %212 = vmatpush1.msra.mxu0 0.0
    %213 = vmatprep.subr.mxu0 0.0
    %214 = vmatpush1.msra.mxu0 0.0
    %215 = vmatprep.subr.mxu0 0.0
    %216 = vmatpush1.msra.mxu0 0.0
    %217 = vmatprep.subr.mxu0 0.0
    %218 = vmatpush1.msra.mxu0 0.0
    %219 = vmatprep.subr.mxu0 0.0
    %220 = vmatpush1.msra.mxu0 0.0
    %221 = vmatprep.subr.mxu0 0.0
    %222 = vmatpush1.msra.mxu0 0.0
    %223 = vmatprep.subr.mxu0 0.0
    %224 = vmatpush1.msra.mxu0 0.0
    %225 = vmatprep.subr.mxu0 0.0
    %226 = vmatpush1.msra.mxu0 0.0
    %227 = vmatprep.subr.mxu0 0.0
    %228 = vmatpush1.msra.mxu0 0.0
    %229 = vmatprep.subr.mxu0 0.0
    %230 = vmatpush1.msra.mxu0 0.0
    %231 = vmatprep.subr.mxu0 0.0
    %232 = vmatpush1.msra.mxu0 0.0
    %233 = vmatprep.subr.mxu0 0.0
    %234 = vmatpush1.msra.mxu0 0.0
    %235 = vmatprep.subr.mxu0 0.0
    %236 = vmatpush1.msra.mxu0 0.0
    %237 = vmatprep.subr.mxu0 0.0
    %238 = vmatpush1.msra.mxu0 0.0
    %239 = vmatprep.subr.mxu0 0.0
    %240 = vmatpush1.msra.mxu0 0.0
    %241 = vmatprep.subr.mxu0 0.0
    %242 = vmatpush1.msra.mxu0 0.0
    %243 = vmatprep.mubr.f32.mxu0 0.0
    %244 = vmatmul.mubr.f32.gmra.mrb[0].mxu0 %v174
    %v245 = vpop.f32.mrb[0].mxu0
    %v246 = vadd.f32 %v170, %v245
    %v247 = vpop.f32.mrb[0].mxu0
    %248 = vmatprep.mubr.f32.mxu0 0.0
    %249 = vmatmul.mubr.f32.gmra.mrb[0].mxu0 %v177
    %v250 = vpop.f32.mrb[0].mxu0
    %v251 = vadd.f32 %v170, %v250
    %v252 = vpop.f32.mrb[0].mxu0
    %253 = vdwg.mxu0
    %vm254 = vcmp.gt.f32.partialorder %v246, 0.0
    %vm255 = vcmp.gt.f32.partialorder %v251, 0.0
    %v256 = vmul.f32 %v246, 0.01
    %v257 = vmul.f32 %v251, 0.01
    %v258 = vsel %vm254, %v246, %v256
    %v259 = vsel %vm255, %v251, %v257
    %v261 = vlaneseq
    %v262 = vshrl.u32 %v261, 7
    %v263 = vsub.s32 0, %v262
    %v264 = vrot.slane %v90, %v263
    %v266 = vmul.f32 %v258, %v264
    %v267 = vmul.f32 %v259, %v264
    %v268 = vsel %vm99, %v266, 0.0
    %269 = vadd.xlane.f32.xlu0 %v268
    %v270 = vpop.xlane.xlu0 %269
    %v271 = vsel %vm99, %v267, 0.0
    %272 = vadd.xlane.f32.xlu0 %v271
    %v273 = vpop.xlane.xlu0 %272
    %v274 = vstv %s91
    %v275 = vadd.f32 %v270, %v274
    %v276 = vadd.f32 %v273, %v274
    %v277 = vsub.f32 0.0, %v275
    %v278 = vmax.f32 %v277, 0.0
    %vm279 = vcmp.ne.f32.partialorder %v277, %v277
    %v280 = vadd.f32 %v277, 0.0
    %v281 = vand.u32 2147483647, %v277
    %v282 = vsub.f32 0.0, %v281
    %v283 = vmul.f32 %v282, 1.442695
    %v284 = vpow.pop %v283
    %v285 = vadd.f32 %v284, 1.0
    %v286 = vlog2.pop %v285
    %v287 = vmul.f32 %v286, 0.6931472
    %v288 = vmul.f32 -0.5, %v284
    %v289 = vadd.f32 %v288, 1.0
    %v290 = vmul.f32 %v289, %v284
    %v291 = vand.u32 2147483647, %v284
    %vm292 = vcmp.lt.f32.partialorder %v291, 0.0004427343
    %v293 = vsel %vm292, %v290, %v287
    %v294 = vadd.f32 %v278, %v293
    %v295 = vsel %vm279, %v280, %v294
    %vm296 = vcmask 7168
    %v297 = vsel %vm296, %v295, 0.0
    %298 = vadd.xlane.f32.xlu0 %v297
    %v299 = vpop.xlane.xlu0 %298
    %v300 = vrot.slane %v299, 4
    %v301 = vadd.f32 %v299, %v300
    %v302 = vrot.slane %v301, 2
    %v303 = vadd.f32 %v301, %v302
    %v304 = vrot.slane %v303, 1
    %v305 = vadd.f32 %v303, %v304
    %s306 = vtos %v305
    %v307 = vrcp.pop 8.0
    %s308 = vtos %v307
    %s309 = smul.f32 %s306, %s308
    %s310 = ssub.f32 0.0, %s309
    %v311 = vmax.f32 %v276, 0.0
    %vm312 = vcmp.ne.f32.partialorder %v276, %v276
    %v313 = vadd.f32 %v276, 0.0
    %v314 = vand.u32 2147483647, %v276
    %v315 = vsub.f32 0.0, %v314
    %v316 = vmul.f32 %v315, 1.442695
    %v317 = vpow.pop %v316
    %v318 = vadd.f32 %v317, 1.0
    %v319 = vlog2.pop %v318
    %v320 = vmul.f32 %v319, 0.6931472
    %v321 = vmul.f32 -0.5, %v317
    %v322 = vadd.f32 %v321, 1.0
    %v323 = vmul.f32 %v322, %v317
    %v324 = vand.u32 2147483647, %v317
    %vm325 = vcmp.lt.f32.partialorder %v324, 0.0004427343
    %v326 = vsel %vm325, %v323, %v320
    %v327 = vadd.f32 %v311, %v326
    %v328 = vsel %vm312, %v313, %v327
    %v329 = vsel %vm296, %v328, 0.0
    %330 = vadd.xlane.f32.xlu0 %v329
    %v331 = vpop.xlane.xlu0 %330
    %v332 = vrot.slane %v331, 4
    %v333 = vadd.f32 %v331, %v332
    %v334 = vrot.slane %v333, 2
    %v335 = vadd.f32 %v333, %v334
    %v336 = vrot.slane %v335, 1
    %v337 = vadd.f32 %v335, %v336
    %s338 = vtos %v337
    %v339 = vrcp.pop 8.0
    %s340 = vtos %v339
    %s341 = smul.f32 %s338, %s340
    %s342 = ssub.f32 %s310, %s341
    %v343 = vstv %s342
    %vm344 = vcmask 0
    %345 = vst.msk [vmem:[#allocation11] sm:$0x1] %vm344, %v343
    // Predicated region
    $region46: #{tpu_custom_call.1} parent=1 // pred_check
      _
    $region47: #{tpu_custom_call.1} parent=1 // pred_check_branch
      %347 = sbr.rel (0) target = $region49
    $region48: #{tpu_custom_call.1} parent=1 // pred_region
      %s349 = ssub.s32 16, 16
      %350 = vsyncadd [#allocation5], %s349
      %s352 = sshll.u32 [#allocation11], 4
      %s353 = int_to_ptr.vmem [resolvable:$true] %s352
      %355 = dma.vmem_to_hbm [thread:$0]  %s353, 16, %s7, [#allocation5]
    $region49: #{tpu_custom_call.1} parent=1 // pred_fallthru
      _
    // Predicated region
    $region50: #{tpu_custom_call.1} parent=1 // pred_check
      _
    $region51: #{tpu_custom_call.1} parent=1 // pred_check_branch
      %357 = sbr.rel (0) target = $region53
    $region52: #{tpu_custom_call.1} parent=1 // pred_region
      %358 = dma.done [#allocation5], 16
    $region53: #{tpu_custom_call.1} parent=1 // pred_fallthru
      _
    %359 = vsyncpa [#allocation4], 1
    %360 = vsyncpa [#allocation7], 1
    %361 = vsyncpa [#allocation10], 1
    %362 = vsyncpa [#allocation5], 1

</llo_original>
